<compile_context>
chip_gen: v7x
topology: tpu7x:2x2x1
jax: 0.10.0
libtpu: 0.0.40
codegen_flags: <defaults>
</compile_context>

<pallas_src>
import functools

import jax
import jax.numpy as jnp
from jax.experimental import pallas as pl
from jax.experimental.pallas import tpu as pltpu


def _round_up(a, m):
    return (a + m - 1) // m * m


def _vmem_capacity_bytes():
    """Physical VMEM of the local chip (64 MiB v7x, 128 MiB v5e/v6e)."""
    try:
        info = pltpu.get_tpu_info()
        cap = getattr(info, "vmem_capacity_bytes", None)
        if cap:
            return int(cap)
    except Exception:
        pass
    return 128 * 1024 * 1024


def _derive_tiling(C, Cp, N, out_bytes, max_tile_n=None):
    """VMEM-derived lane tile TN, padded N and a computed scoped-VMEM limit.

    Dominant per-lane-column cost is pass 2: double-buffered f32 x input tile
    plus double-buffered output tile.  TN is the largest multiple of 128 whose
    working set fits ~55% of physical VMEM (headroom for Mosaic scratch).
    """
    vmem_phys = _vmem_capacity_bytes()
    bytes_per_col = 2 * C * 4 + 2 * C * out_bytes          # x in (2x) + out (2x)
    budget = int(vmem_phys * 0.55)
    tn_cap = max(128, budget // max(bytes_per_col, 1))
    if max_tile_n is not None:
        tn_cap = min(tn_cap, max_tile_n)
    tn = max(128, (min(tn_cap, 8192) // 128) * 128)
    tn = min(tn, _round_up(N, 128))
    n_pad = _round_up(N, tn)
    # Fixed blocks: stacked [wp;wg;wq] (bf16), wq (bf16), scale/bias, stats acc.
    fixed = 2 * (3 * Cp * C * 2 + C * C * 2 + 2 * C * 4 + Cp * 3 * 4)
    working = bytes_per_col * tn + fixed
    vmem_limit = max(32 << 20, min(int(vmem_phys * 0.85), working + (12 << 20)))
    return tn, n_pad, vmem_limit


def _stats_kernel(x_ref, w_ref, stats_ref, *, Cp, mxu_dtype):
    """Pass 1: accumulate per-channel sums of p*g, q and q^2 across N-tiles."""
    @pl.when(pl.program_id(2) == 0)
    def _init():
        stats_ref[...] = jnp.zeros(stats_ref.shape, stats_ref.dtype)

    x = x_ref[0].astype(mxu_dtype)                                     # (C, TN)
    # One fused MXU matmul (bf16 operands, f32 accumulate).  Row blocks are
    # padded to Cp = round_up(C, 8) so these slices are sublane-aligned views:
    # [0:Cp)=p, [Cp:2Cp)=g, [2Cp:3Cp)=q (= Wz_blockdiag @ Wt @ x); pad rows = 0.
    pgq = jnp.dot(w_ref[...], x, preferred_element_type=jnp.float32)   # (3Cp, TN)
    p = pgq[0:Cp]
    g = pgq[Cp:2 * Cp]
    q = pgq[2 * Cp:3 * Cp]
    # Three direct column accumulations into the resident (Cp, 3) accumulator
    # (no lane concatenate).
    stats_ref[0, 0, :, 0:1] += jnp.sum(p * g, axis=-1, keepdims=True)  # att numer
    stats_ref[0, 0, :, 1:2] += jnp.sum(q, axis=-1, keepdims=True)      # sum(z)/att
    stats_ref[0, 0, :, 2:3] += jnp.sum(q * q, axis=-1, keepdims=True)  # sum(z^2)/att^2


def _apply_kernel(x_ref, wq_ref, scale_ref, bias_ref, o_ref, *, mxu_dtype):
    """Pass 2: out = q * scale + bias + residual (q recomputed on the MXU)."""
    x = x_ref[0].astype(jnp.float32)                                   # (C, TN)
    q = jnp.dot(wq_ref[...], x_ref[0].astype(mxu_dtype),
                preferred_element_type=jnp.float32)                    # (C, TN)
    o_ref[0] = (q * scale_ref[0] + bias_ref[0] + x).astype(o_ref.dtype)


def nonlocal_forward(x, wt, wp, wg, wz, gn_w, gn_b, *, groups=1,
                     use_scale=False, eps=1e-5, max_tile_n=None,
                     mxu_dtype=jnp.bfloat16, out_dtype=None):
    """x: (B, C, D, H, W); wt/wp/wg: (C, C); wz: (C, C//groups); gn_*: (C,).

    max_tile_n: optional cap on the lane tile (None = derive from VMEM).
    mxu_dtype:  matmul operand dtype (bf16 default; f32 precision fallback).
    out_dtype:  output dtype (None = x.dtype; bf16 halves writeback traffic).
    """
    B, C, D, H, W = x.shape
    assert C % groups == 0, "channels must be divisible by groups"
    N = D * H * W
    Cg = C // groups
    Cp = _round_up(C, 8)
    out_dtype = x.dtype if out_dtype is None else out_dtype
    out_bytes = jnp.dtype(out_dtype).itemsize

    TN, N_pad, vmem_limit = _derive_tiling(C, Cp, N, out_bytes, max_tile_n)
    n_tiles = N_pad // TN

    x_flat = x.reshape(B, C, N)
    if N_pad != N:
        # Zero padding is exact: padded columns contribute 0 to every statistic
        # and padded output columns are sliced off below.
        x_flat = jnp.pad(x_flat, ((0, 0), (0, 0), (0, N_pad - N)))

    # Fold the grouped z-conv into a dense block-diagonal matrix, pre-multiply
    # with wt once (q = (Wz_bd @ Wt) @ x, z = att * q), and stack [wp; wg; wq]
    # with each block padded to Cp rows (sublane-aligned in-kernel row slices).
    wz_bd = jnp.zeros((C, C), jnp.float32)
    for gi in range(groups):
        sl = slice(gi * Cg, (gi + 1) * Cg)
        wz_bd = wz_bd.at[sl, sl].set(wz[sl, :])
    wq = jnp.dot(wz_bd, wt)                                # (C, C) f32
    w_pgq = jnp.zeros((3 * Cp, C), jnp.float32)
    w_pgq = w_pgq.at[0:C].set(wp)
    w_pgq = w_pgq.at[Cp:Cp + C].set(wg)
    w_pgq = w_pgq.at[2 * Cp:2 * Cp + C].set(wq)

    # v7x megacore: only 'parallel' grid axes shard across the 2 TensorCores.
    # When B can't feed both cores, add a parallel split of the N axis in
    # pass 1; partial statistics are summed on the host.
    n_split = 2 if (B % 2 == 1 and n_tiles % 2 == 0 and n_tiles >= 2) else 1
    tiles_per_split = n_tiles // n_split

    # -------- pass 1: accumulate attention & GroupNorm statistics --------
    stats = pl.pallas_call(
        functools.partial(_stats_kernel, Cp=Cp, mxu_dtype=mxu_dtype),
        out_shape=jax.ShapeDtypeStruct((B, n_split, Cp, 3), jnp.float32),
        grid_spec=pltpu.PrefetchScalarGridSpec(
            num_scalar_prefetch=0,
            grid=(B, n_split, tiles_per_split),
            in_specs=[
                pl.BlockSpec((1, C, TN),
                             lambda b, s, n: (b, 0, s * tiles_per_split + n)),
                pl.BlockSpec((3 * Cp, C), lambda b, s, n: (0, 0)),
            ],
            out_specs=pl.BlockSpec((1, 1, Cp, 3), lambda b, s, n: (b, s, 0, 0)),
        ),
        compiler_params=pltpu.CompilerParams(
            dimension_semantics=("parallel", "parallel", "arbitrary"),
            vmem_limit_bytes=vmem_limit),
        cost_estimate=pl.CostEstimate(
            flops=2 * B * 3 * Cp * C * N_pad + 5 * B * Cp * N_pad,
            transcendentals=0,
            bytes_accessed=4 * B * C * N_pad + 2 * 3 * Cp * C
            + 4 * B * n_split * Cp * 3),
    )(x_flat, w_pgq.astype(mxu_dtype))

    # -------- tiny per-(batch, group) scalar math in plain JAX --------
    stats = stats.sum(axis=1)[:, :C, :]                    # (B, C, 3)
    s = stats.reshape(B, groups, Cg, 3).sum(axis=2)        # (B, groups, 3)
    att = s[..., 0]                                        # sum(p*g) per group
    if use_scale:
        att = att * (1.0 / float((Cg * N) ** 0.5))
    cnt = float(Cg * N)
    mean = att * s[..., 1] / cnt                           # mean of z = att*q
    ex2 = (att * att) * s[..., 2] / cnt                    # E[z^2]
    # One-pass variance E[z^2]-E[z]^2 in f32, clamped at 0.  Accurate as long as
    # |mean(z)| is not >> std(z) (true for zero-mean 1x1 conv activations).
    var = jnp.maximum(ex2 - mean * mean, 0.0)
    rstd = jax.lax.rsqrt(var + eps)                        # eps on var(z), as in ref
    att_rstd_c = jnp.repeat(att * rstd, Cg, axis=1)        # (B, C)
    mean_rstd_c = jnp.repeat(mean * rstd, Cg, axis=1)      # (B, C)
    scale = (att_rstd_c * gn_w[None, :]).reshape(B, C, 1).astype(jnp.float32)
    bias = (gn_b[None, :] - mean_rstd_c * gn_w[None, :]).reshape(B, C, 1).astype(jnp.float32)

    # -------- pass 2: q = Wq x fused with norm/affine/residual --------
    out = pl.pallas_call(
        functools.partial(_apply_kernel, mxu_dtype=mxu_dtype),
        out_shape=jax.ShapeDtypeStruct((B, C, N_pad), out_dtype),
        grid_spec=pltpu.PrefetchScalarGridSpec(
            num_scalar_prefetch=0,
            grid=(B, n_tiles),
            in_specs=[
                pl.BlockSpec((1, C, TN), lambda b, n: (b, 0, n)),   # x tile
                pl.BlockSpec((C, C), lambda b, n: (0, 0)),          # wq
                pl.BlockSpec((1, C, 1), lambda b, n: (b, 0, 0)),    # scale
                pl.BlockSpec((1, C, 1), lambda b, n: (b, 0, 0)),    # bias
            ],
            out_specs=pl.BlockSpec((1, C, TN), lambda b, n: (b, 0, n)),
        ),
        compiler_params=pltpu.CompilerParams(
            dimension_semantics=("parallel", "parallel"),
            vmem_limit_bytes=vmem_limit),
        cost_estimate=pl.CostEstimate(
            flops=2 * B * C * C * N_pad + 3 * B * C * N_pad,
            transcendentals=0,
            bytes_accessed=(4 + out_bytes) * B * C * N_pad + 2 * C * C + 8 * B * C),
    )(x_flat, wq.astype(mxu_dtype), scale, bias)

    if N_pad != N:
        out = out[:, :, :N]
    return out.reshape(B, C, D, H, W)


def nonlocal_reference(x, wt, wp, wg, wz, gn_w, gn_b, *, groups=1,
                       use_scale=False, eps=1e-5):
    """Pure-JAX reference mirroring the PyTorch forward."""
    B, C, D, H, W = x.shape
    N = D * H * W
    Cg = C // groups
    xf = x.reshape(B, C, N)
    t = jnp.einsum('oc,bcn->bon', wt, xf)
    p = jnp.einsum('oc,bcn->bon', wp, xf)
    g = jnp.einsum('oc,bcn->bon', wg, xf)
    tg = t.reshape(B, groups, Cg, N)
    pg = p.reshape(B, groups, Cg, N)
    gg = g.reshape(B, groups, Cg, N)
    att = jnp.sum(pg * gg, axis=(2, 3), keepdims=True)      # (B, G, 1, 1)
    if use_scale:
        att = att / jnp.sqrt(jnp.float32(Cg * N))
    y = att * tg
    wz_g = wz.reshape(groups, Cg, Cg)
    z = jnp.einsum('goc,bgcn->bgon', wz_g, y)
    mean = jnp.mean(z, axis=(2, 3), keepdims=True)
    var = jnp.mean((z - mean) ** 2, axis=(2, 3), keepdims=True)
    zn = ((z - mean) / jnp.sqrt(var + eps)).reshape(B, C, N)
    out = zn * gn_w[None, :, None] + gn_b[None, :, None] + xf
    return out.reshape(B, C, D, H, W)


if __name__ == "__main__":
    def run_case(name, B, C, D, H, W, groups, use_scale, max_tile_n, seed):
        Cg = C // groups
        key = jax.random.PRNGKey(seed)
        k = jax.random.split(key, 8)
        x = jax.random.normal(k[0], (B, C, D, H, W), jnp.float32)
        # kaiming_normal_(fan_in, 'relu') for 1x1x1 conv: std = sqrt(2 / fan_in)
        wt = jax.random.normal(k[1], (C, C), jnp.float32) * (2.0 / C) ** 0.5
        wp = jax.random.normal(k[2], (C, C), jnp.float32) * (2.0 / C) ** 0.5
        # Correlate wg with wp so the attention scalar sum(p*g) is well away from
        # zero; keeps the bf16-vs-f32 comparison well conditioned (a trained net's
        # attention is likewise not adversarially near zero). Semantics unchanged.
        wg = 0.8 * wp + 0.6 * jax.random.normal(k[3], (C, C), jnp.float32) * (2.0 / C) ** 0.5
        wz = jax.random.normal(k[4], (C, Cg), jnp.float32) * (2.0 / Cg) ** 0.5
        # NOTE: the PyTorch __init__ zero-inits the GroupNorm affine params, which
        # makes the forward exactly equal the residual; small nonzero values are
        # used here so the full compute path is actually exercised.
        gn_w = jax.random.normal(k[5], (C,), jnp.float32) * 0.1
        gn_b = jax.random.normal(k[6], (C,), jnp.float32) * 0.1

        out = nonlocal_forward(x, wt, wp, wg, wz, gn_w, gn_b, groups=groups,
                               use_scale=use_scale, max_tile_n=max_tile_n)
        out = jax.block_until_ready(out)
        ref = nonlocal_reference(x, wt, wp, wg, wz, gn_w, gn_b, groups=groups,
                                 use_scale=use_scale)
        err = float(jnp.max(jnp.abs(out.astype(jnp.float32) - ref)))
        # bf16 MXU operands (f32 accumulation) dominate the tolerance.
        assert err < 2e-2, f"case {name}: mismatch vs reference, max abs err = {err}"

    # Case A: even batch, N = 256 split into two 128-wide lane tiles
    # (exercises the cross-tile "arbitrary" stats accumulation).
    run_case("A", B=2, C=4, D=4, H=8, W=8, groups=2, use_scale=False,
             max_tile_n=128, seed=0)
    # Case B: odd batch (exercises the parallel N-split for v7x), N = 200 not a
    # multiple of 128 (exercises zero padding), grouped z-conv + use_scale.
    run_case("B", B=1, C=8, D=5, H=5, W=8, groups=2, use_scale=True,
             max_tile_n=128, seed=0)
    print("KERNEL_OK")
</pallas_src>

<mosaic_0001>
module attributes {stable_mosaic.version = 11 : i64} {
  func.func @_stats_kernel(%arg0: i32, %arg1: i32, %arg2: i32, %arg3: memref<1x4x128xf32, #tpu.memory_space<vmem>>, %arg4: memref<24x4xbf16, #tpu.memory_space<vmem>>, %arg5: memref<1x1x8x3xf32, #tpu.memory_space<vmem>>) attributes {dimension_semantics = [#tpu.dimension_semantics<parallel>, #tpu.dimension_semantics<parallel>, #tpu.dimension_semantics<arbitrary>], iteration_bounds = array<i64: 2, 1, 2>, scalar_prefetch = 0 : i64, scratch_operands = 0 : i64, tpu.core_type = #tpu.core_type<tc>, window_params = [{transform_indices = @transform_0, window_bounds = array<i64: 1, 4, 128>}, {pipeline_mode = #tpu.pipeline_mode<synchronous>, transform_indices = @transform_1, window_bounds = array<i64: 24, 4>}, {transform_indices = @transform_2, window_bounds = array<i64: 1, 1, 8, 3>}]} {
    %c0_i32 = arith.constant 0 : i32
    %0 = arith.cmpi eq, %arg2, %c0_i32 : i32
    %1 = arith.extui %0 : i1 to i32
    %c0_i32_0 = arith.constant 0 : i32
    %2 = arith.cmpi ne, %1, %c0_i32_0 : i32
    scf.if %2 {
      %cst_30 = arith.constant 0.000000e+00 : f32
      %37 = vector.broadcast %cst_30 : f32 to vector<1x1x8x3xf32>
      %c0_31 = arith.constant 0 : index
      %c0_32 = arith.constant 0 : index
      %c0_33 = arith.constant 0 : index
      %c0_34 = arith.constant 0 : index
      %38 = vector.load %arg5[%c0_31, %c0_32, %c0_33, %c0_34] : memref<1x1x8x3xf32, #tpu.memory_space<vmem>>, vector<1x1x8x3xf32>
      tpu.vector_store %arg5[%c0_31, %c0_32, %c0_33, %c0_34], %37 {strides = array<i32>} : memref<1x1x8x3xf32, #tpu.memory_space<vmem>>, vector<1x1x8x3xf32>,
    } else {
    }
    %c0 = arith.constant 0 : index
    %c0_1 = arith.constant 0 : index
    %c0_2 = arith.constant 0 : index
    %3 = vector.load %arg3[%c0, %c0_1, %c0_2] : memref<1x4x128xf32, #tpu.memory_space<vmem>>, vector<1x4x128xf32>
    %4 = vector.shape_cast %3 : vector<1x4x128xf32> to vector<4x128xf32>
    %5 = arith.truncf %4 : vector<4x128xf32> to vector<4x128xbf16>
    %c0_3 = arith.constant 0 : index
    %c0_4 = arith.constant 0 : index
    %6 = vector.load %arg4[%c0_3, %c0_4] : memref<24x4xbf16, #tpu.memory_space<vmem>>, vector<24x4xbf16>
    %cst = arith.constant dense<0.000000e+00> : vector<24x128xf32>
    %7 = tpu.matmul %6, %5, %cst {dimension_numbers = #tpu.dot_dimension_numbers<[1], [0], [0], [1], [0, 0, 1, 1], [], []>} : vector<24x4xbf16>, vector<4x128xbf16>, vector<24x128xf32> -> vector<24x128xf32>
    %8 = vector.extract_strided_slice %7 {offsets = [0, 0], sizes = [8, 128], strides = [1, 1]} : vector<24x128xf32> to vector<8x128xf32>
    %9 = vector.extract_strided_slice %7 {offsets = [8, 0], sizes = [8, 128], strides = [1, 1]} : vector<24x128xf32> to vector<8x128xf32>
    %10 = vector.extract_strided_slice %7 {offsets = [16, 0], sizes = [8, 128], strides = [1, 1]} : vector<24x128xf32> to vector<8x128xf32>
    %c0_5 = arith.constant 0 : index
    %c0_6 = arith.constant 0 : index
    %c0_7 = arith.constant 0 : index
    %c0_8 = arith.constant 0 : index
    %11 = vector.load %arg5[%c0_5, %c0_6, %c0_7, %c0_8] : memref<1x1x8x3xf32, #tpu.memory_space<vmem>>, vector<1x1x8x1xf32>
    %12 = vector.shape_cast %11 : vector<1x1x8x1xf32> to vector<8x1xf32>
    %13 = arith.mulf %8, %9 : vector<8x128xf32>
    %cst_9 = arith.constant dense<0.000000e+00> : vector<8xf32>
    %14 = vector.multi_reduction <add>, %13, %cst_9 [1] : vector<8x128xf32> to vector<8xf32>
    %15 = vector.shape_cast %14 : vector<8xf32> to vector<8x1xf32>
    %16 = arith.addf %12, %15 : vector<8x1xf32>
    %c0_10 = arith.constant 0 : index
    %c0_11 = arith.constant 0 : index
    %c0_12 = arith.constant 0 : index
    %c0_13 = arith.constant 0 : index
    %17 = vector.load %arg5[%c0_10, %c0_11, %c0_12, %c0_13] : memref<1x1x8x3xf32, #tpu.memory_space<vmem>>, vector<1x1x8x1xf32>
    %18 = vector.shape_cast %17 : vector<1x1x8x1xf32> to vector<8x1xf32>
    %19 = vector.shape_cast %16 : vector<8x1xf32> to vector<1x1x8x1xf32>
    tpu.vector_store %arg5[%c0_10, %c0_11, %c0_12, %c0_13], %19 {strides = array<i32>} : memref<1x1x8x3xf32, #tpu.memory_space<vmem>>, vector<1x1x8x1xf32>,
    %c0_14 = arith.constant 0 : index
    %c0_15 = arith.constant 0 : index
    %c0_16 = arith.constant 0 : index
    %c1 = arith.constant 1 : index
    %20 = vector.load %arg5[%c0_14, %c0_15, %c0_16, %c1] : memref<1x1x8x3xf32, #tpu.memory_space<vmem>>, vector<1x1x8x1xf32>
    %21 = vector.shape_cast %20 : vector<1x1x8x1xf32> to vector<8x1xf32>
    %cst_17 = arith.constant dense<0.000000e+00> : vector<8xf32>
    %22 = vector.multi_reduction <add>, %10, %cst_17 [1] : vector<8x128xf32> to vector<8xf32>
    %23 = vector.shape_cast %22 : vector<8xf32> to vector<8x1xf32>
    %24 = arith.addf %21, %23 : vector<8x1xf32>
    %c0_18 = arith.constant 0 : index
    %c0_19 = arith.constant 0 : index
    %c0_20 = arith.constant 0 : index
    %c1_21 = arith.constant 1 : index
    %25 = vector.load %arg5[%c0_18, %c0_19, %c0_20, %c1_21] : memref<1x1x8x3xf32, #tpu.memory_space<vmem>>, vector<1x1x8x1xf32>
    %26 = vector.shape_cast %25 : vector<1x1x8x1xf32> to vector<8x1xf32>
    %27 = vector.shape_cast %24 : vector<8x1xf32> to vector<1x1x8x1xf32>
    tpu.vector_store %arg5[%c0_18, %c0_19, %c0_20, %c1_21], %27 {strides = array<i32>} : memref<1x1x8x3xf32, #tpu.memory_space<vmem>>, vector<1x1x8x1xf32>,
    %c0_22 = arith.constant 0 : index
    %c0_23 = arith.constant 0 : index
    %c0_24 = arith.constant 0 : index
    %c2 = arith.constant 2 : index
    %28 = vector.load %arg5[%c0_22, %c0_23, %c0_24, %c2] : memref<1x1x8x3xf32, #tpu.memory_space<vmem>>, vector<1x1x8x1xf32>
    %29 = vector.shape_cast %28 : vector<1x1x8x1xf32> to vector<8x1xf32>
    %30 = arith.mulf %10, %10 : vector<8x128xf32>
    %cst_25 = arith.constant dense<0.000000e+00> : vector<8xf32>
    %31 = vector.multi_reduction <add>, %30, %cst_25 [1] : vector<8x128xf32> to vector<8xf32>
    %32 = vector.shape_cast %31 : vector<8xf32> to vector<8x1xf32>
    %33 = arith.addf %29, %32 : vector<8x1xf32>
    %c0_26 = arith.constant 0 : index
    %c0_27 = arith.constant 0 : index
    %c0_28 = arith.constant 0 : index
    %c2_29 = arith.constant 2 : index
    %34 = vector.load %arg5[%c0_26, %c0_27, %c0_28, %c2_29] : memref<1x1x8x3xf32, #tpu.memory_space<vmem>>, vector<1x1x8x1xf32>
    %35 = vector.shape_cast %34 : vector<1x1x8x1xf32> to vector<8x1xf32>
    %36 = vector.shape_cast %33 : vector<8x1xf32> to vector<1x1x8x1xf32>
    tpu.vector_store %arg5[%c0_26, %c0_27, %c0_28, %c2_29], %36 {strides = array<i32>} : memref<1x1x8x3xf32, #tpu.memory_space<vmem>>, vector<1x1x8x1xf32>,
    return
  }
  func.func @transform_0(%arg0: i32, %arg1: i32, %arg2: i32) -> (i32, i32, i32) {
    %c2_i32 = arith.constant 2 : i32
    %0 = arith.muli %arg1, %c2_i32 : i32
    %1 = arith.addi %0, %arg2 : i32
    %c0_i32 = arith.constant 0 : i32
    %c0_i32_0 = arith.constant 0 : i32
    return %arg0, %c0_i32, %1 : i32, i32, i32
  }
  func.func @transform_1(%arg0: i32, %arg1: i32, %arg2: i32) -> (i32, i32) {
    %c0_i32 = arith.constant 0 : i32
    %c0_i32_0 = arith.constant 0 : i32
    %c0_i32_1 = arith.constant 0 : i32
    return %c0_i32, %c0_i32_0 : i32, i32
  }
  func.func @transform_2(%arg0: i32, %arg1: i32, %arg2: i32) -> (i32, i32, i32, i32) {
    %c0_i32 = arith.constant 0 : i32
    %c0_i32_0 = arith.constant 0 : i32
    %c0_i32_1 = arith.constant 0 : i32
    return %arg0, %arg1, %c0_i32, %c0_i32_0 : i32, i32, i32, i32
  }
}

</mosaic_0001>

<llo_original>
// kernel: tpu_custom_call.1
$region0: #{tpu_custom_call.1}
  #allocation0 [shape = 'u32[]', space=smem, size = 0x4, offset = 0x4, fixed_abs, tag = 'smem constant byte address 0x4 - core index']
  #allocation1 [shape = 'u32[144,128]{1,0:T(1,128)}', space=vmem, size = 0x12000, scoped, tag = 'internal scratch']
  %s0 = inlined_call_operand.hbm [shape: f32[2,4,256], index: 0, kind: input, shape index: {}]
  %s1 = inlined_call_operand.vmem [shape: bf16[24,4], index: 1, kind: input, shape index: {}]
  %s2 = inlined_call_operand.vmem [shape: f32[2,1,8,3], index: 2, kind: output, shape index: {}]
  %s3 = sld [smem:[#allocation0]]
  $region49: #{tpu_custom_call.1} parent=0
    _
  %s5 = ssub.s32 1, %s3
  %s6 = scalar_select 0, %s5, %s3
  $region1: #{tpu_custom_call.1} parent=0
    #allocation2 [shape = 'u8[4096]{0}', space=vmem, size = 0x1000, scoped, tag = 'input window, operand 0']
    #allocation3 [shape = 's32[2]{0}', space=sflag, size = 0x8, scoped, tag = 'scoped memory for tpu_custom_call.1']
    %7 = vsyncpa [#allocation3], 0
    %s8 = scalar_lea.sflag [#allocation3], 1
    %9 = vsyncpa %s8, 0
    loop: start=0, step=1, limit=6
    $region2: #{tpu_custom_call.1} parent=1 // loop_pre_header
      _
    $region3: #{tpu_custom_call.1} parent=1 // loop_header
      %s11 = sphi 0, %s15
      %p12 = scmp.ge.s32.totalorder %s11, 6
      %s18 = sphi 0, %s37
      %s19 = sphi 0, %s33
      %s20 = sphi 0, %s29
      %s21 = sphi 0, %s18
      %s22 = sphi 0, %s19
      %s23 = sphi 0, %s20
      %s24 = sphi 0, %s21
      %s25 = sphi 0, %s22
      %s26 = sphi 0, %s23
      %s46 = sphi 0, %s48
      %s49 = sphi 0, %s46
      %s50 = sphi 0, %s49
      %s66 = sphi 0, %s50
      %s70 = sphi 0, %s70
      %s72 = sphi 0, %s70
      %s73 = sphi 0, %s72
      %s87 = sphi 0, %s73
      %s95 = sphi 0, %s97
      %s98 = sphi 0, %s95
      %s99 = sphi 0, %s98
      %s115 = sphi 0, %s99
    $region4: #{tpu_custom_call.1} parent=1 // loop_header_branch
      %14 = sbr.rel (%p12) target = $region8
    $region5: #{tpu_custom_call.1} parent=1 // loop_body
      %s16 = ssub.s32 %s11, 1
      %s17 = ssub.s32 %s11, 2
      %s27 = sadd.s32 1, %s20
      %p28 = scmp.ge.s32.totalorder %s27, 2
      %s29 = scalar_select %p28, 0, %s27
      %s30 = sadd.s32 1, %s19
      %s31 = scalar_select %p28, %s30, %s19
      %p32 = scmp.ge.s32.totalorder %s31, 1
      %s33 = scalar_select %p32, 0, %s31
      %s34 = sadd.s32 1, %s18
      %s35 = scalar_select %p32, %s34, %s18
      %p36 = scmp.ge.s32.totalorder %s35, 2
      %s37 = scalar_select %p36, 0, %s35
      %s38 = smul.u32 %s19, 2
      %s39 = sadd.s32 %s38, %s20
      %s40 = smul.u32 %s33, 2
      %s41 = sadd.s32 %s40, %s29
      %s42 = ssub.s32 %s18, %s37
      %s43 = ssub.s32 %s39, %s41
      %s44 = sor.u32 %s42, %s43
      %p45 = scmp.eq.s32.totalorder %s44, 0
      %s47 = sadd.s32 %s46, 1
      %s48 = scalar_select %p45, %s46, %s47
      %p51 = pneg %p45
      %p52 = scmp.eq.s32.totalorder %s11, 3
      %p53 = por %p51, %p52
      %p54 = scmp.ne.s32.totalorder %s46, %s49
      %p55 = scmp.eq.s32.totalorder %s11, 0
      %p56 = por %p54, %p55
      %p57 = scmp.ne.s32.totalorder %s46, %s49
      %p58 = scmp.eq.s32.totalorder %s16, 3
      %p59 = por %p57, %p58
      %p60 = scmp.ne.s32.totalorder %s49, %s50
      %p61 = scmp.eq.s32.totalorder %s16, 0
      %p62 = por %p60, %p61
      %p63 = scmp.ne.s32.totalorder %s49, %s50
      %p64 = scmp.eq.s32.totalorder %s17, 3
      %p65 = por %p63, %p64
      %p67 = scmp.ne.s32.totalorder %s50, %s66
      %p68 = scmp.eq.s32.totalorder %s17, 0
      %p69 = por %p67, %p68
      %s71 = sadd.s32 %s70, 1
      %p74 = scmp.eq.s32.totalorder %s11, 3
      %p75 = scmp.ne.s32.totalorder %s70, %s72
      %p76 = scmp.eq.s32.totalorder %s11, 0
      %p77 = por %p75, %p76
      %p78 = scmp.ne.s32.totalorder %s70, %s72
      %p79 = scmp.eq.s32.totalorder %s16, 3
      %p80 = por %p78, %p79
      %p81 = scmp.ne.s32.totalorder %s72, %s73
      %p82 = scmp.eq.s32.totalorder %s16, 0
      %p83 = por %p81, %p82
      %p84 = scmp.ne.s32.totalorder %s72, %s73
      %p85 = scmp.eq.s32.totalorder %s17, 3
      %p86 = por %p84, %p85
      %p88 = scmp.ne.s32.totalorder %s73, %s87
      %p89 = scmp.eq.s32.totalorder %s17, 0
      %p90 = por %p88, %p89
      %s91 = ssub.s32 %s18, %s37
      %s92 = ssub.s32 %s19, %s33
      %s93 = sor.u32 %s91, %s92
      %p94 = scmp.eq.s32.totalorder %s93, 0
      %s96 = sadd.s32 %s95, 1
      %s97 = scalar_select %p94, %s95, %s96
      %p100 = pneg %p94
      %p101 = scmp.eq.s32.totalorder %s11, 3
      %p102 = por %p100, %p101
      %p103 = scmp.ne.s32.totalorder %s95, %s98
      %p104 = scmp.eq.s32.totalorder %s11, 0
      %p105 = por %p103, %p104
      %p106 = scmp.ne.s32.totalorder %s95, %s98
      %p107 = scmp.eq.s32.totalorder %s16, 3
      %p108 = por %p106, %p107
      %p109 = scmp.ne.s32.totalorder %s98, %s99
      %p110 = scmp.eq.s32.totalorder %s16, 0
      %p111 = por %p109, %p110
      %p112 = scmp.ne.s32.totalorder %s98, %s99
      %p113 = scmp.eq.s32.totalorder %s17, 3
      %p114 = por %p112, %p113
      %p116 = scmp.ne.s32.totalorder %s99, %s115
      %p117 = scmp.eq.s32.totalorder %s17, 0
      %p118 = por %p116, %p117
      %p119 = scmp.le.s32.totalorder 1, %s11
      %p120 = scmp.lt.s32.totalorder %s11, 5
      %p121 = pnand %p119, %p120
      %p122 = pneg %p121
      // Predicated region
      $region9: #{tpu_custom_call.1} parent=5 // pred_check
        _
      $region10: #{tpu_custom_call.1} parent=5 // pred_check_branch
        %124 = sbr.rel (%p121) target = $region12
      $region11: #{tpu_custom_call.1} parent=5 // pred_region
        %s125 = ssub.s32 %s11, 1
        // Predicated region
        $region13: #{tpu_custom_call.1} parent=11 // pred_check
          %p126 = pneg %p83
        $region14: #{tpu_custom_call.1} parent=11 // pred_check_branch
          %128 = sbr.rel (%p126) target = $region16
        $region15: #{tpu_custom_call.1} parent=11 // pred_region
          _
        $region16: #{tpu_custom_call.1} parent=11 // pred_fallthru
          _
      $region12: #{tpu_custom_call.1} parent=5 // pred_fallthru
        _
      %p129 = scmp.lt.s32.totalorder %s11, 4
      // Predicated region
      $region17: #{tpu_custom_call.1} parent=5 // pred_check
        %p130 = pneg %p129
      $region18: #{tpu_custom_call.1} parent=5 // pred_check_branch
        %132 = sbr.rel (%p130) target = $region20
      $region19: #{tpu_custom_call.1} parent=5 // pred_region
        // Predicated region
        $region21: #{tpu_custom_call.1} parent=19 // pred_check
          %p133 = pneg %p56
        $region22: #{tpu_custom_call.1} parent=19 // pred_check_branch
          %135 = sbr.rel (%p133) target = $region24
        $region23: #{tpu_custom_call.1} parent=19 // pred_region
          %s136 = sand.u32 %s46, 1
          %s137 = scalar_lea.sflag [#allocation3], %s136
          %s138 = sand.u32 %s46, 1
          %s139 = smul.addr %s138, 4
          %s140 = scalar_lea.vmem [#allocation2], %s139
          %s141 = smul.u32 %s19, 2
          %s142 = sadd.s32 %s141, %s20
          %s144 = ssub.s32 64, 64
          %145 = vsyncadd %s137, %s144
          %s146 = smul.addr %s18, 2
          %s147 = sadd.s32 %s142, %s146
          %s148 = smul.addr %s147, 64
          %s149 = scalar_lea.hbm %s0, %s148
          %s151 = sshll.u32 %s140, 4
          %s152 = int_to_ptr.vmem [resolvable:$true] %s151
          %154 = dma.hbm_to_vmem [thread:$0]  %s149, 64, %s152, %s137
        $region24: #{tpu_custom_call.1} parent=19 // pred_fallthru
          _
      $region20: #{tpu_custom_call.1} parent=5 // pred_fallthru
        _
      %p155 = scmp.le.s32.totalorder 1, %s11
      %p156 = scmp.lt.s32.totalorder %s11, 5
      %p157 = pnand %p155, %p156
      %p158 = pneg %p157
      // Predicated region
      $region25: #{tpu_custom_call.1} parent=5 // pred_check
        _
      $region26: #{tpu_custom_call.1} parent=5 // pred_check_branch
        %160 = sbr.rel (%p157) target = $region28
      $region27: #{tpu_custom_call.1} parent=5 // pred_region
        %s161 = ssub.s32 %s11, 1
        %s162 = sand.u32 %s49, 1
        %s163 = scalar_lea.sflag [#allocation3], %s162
        %s164 = sand.u32 %s49, 1
        %s165 = smul.addr %s164, 4
        %s166 = scalar_lea.vmem [#allocation2], %s165
        // Predicated region
        $region29: #{tpu_custom_call.1} parent=27 // pred_check
          %p167 = pneg %p62
        $region30: #{tpu_custom_call.1} parent=27 // pred_check_branch
          %169 = sbr.rel (%p167) target = $region32
        $region31: #{tpu_custom_call.1} parent=27 // pred_region
          %170 = dma.done %s163, 64
        $region32: #{tpu_custom_call.1} parent=27 // pred_fallthru
          _
        %s171 = sand.u32 %s49, 1
        %s172 = scalar_lea.sflag [#allocation3], %s171
        %s173 = sand.u32 %s49, 1
        %s174 = smul.addr %s173, 4
        %s175 = scalar_lea.vmem [#allocation2], %s174
        %p176 = pneg %p62
        %p177 = pneg %p59
        %p178 = pneg %p83
        %p179 = pneg %p80
        %p180 = pneg %p111
        %p181 = pneg %p108
        %p182 = scmp.lt.s32.totalorder %s21, 1
        %s183 = scalar_select %p182, %s21, 1
        %p184 = scmp.lt.s32.totalorder %s22, 0
        %s185 = scalar_select %p184, %s22, 0
        %s186 = sadd.s32 %s185, %s183
        %s187 = smul.addr %s186, 8
        %s188 = scalar_lea.vmem %s2, %s187
        %s189 = smul.u32 %s22, 2
        %s190 = sadd.s32 %s189, %s23
        %p191 = scmp.lt.s32.totalorder %s21, 1
        %s192 = scalar_select %p191, %s21, 1
        %p193 = scmp.lt.s32.totalorder %s22, 0
        %s194 = scalar_select %p193, %s22, 0
        %s195 = sadd.s32 %s194, %s192
        %s196 = smul.addr %s195, 8
        %s197 = scalar_lea.vmem %s2, %s196
        %p199 = scmp.eq.s32.totalorder %s23, 0
        // Predicated region
        $region33: #{tpu_custom_call.1} parent=27 // pred_check
          %p200 = pneg %p199
        $region34: #{tpu_custom_call.1} parent=27 // pred_check_branch
          %202 = sbr.rel (%p200) target = $region36
        $region35: #{tpu_custom_call.1} parent=27 // pred_region
          %vm203 = vcmask 23552
          %204 = vst.msk [vmem:[%s197] sm:$0xff] %vm203, 0.0
        $region36: #{tpu_custom_call.1} parent=27 // pred_fallthru
          _
        %v205 = vld [vmem:[%s166] sm:$0xf]
        %v206 = vpack.c.bf16 %v205, %v205
        %v207 = vld [vmem:[%s1] sm:$0xf]
        %v208 = vld [vmem:[%s1 + $0x4] sm:$0xf]
        %v209 = vld [vmem:[%s1 + $0x8] sm:$0xf]
        %v213 = vunpack.c.l.b16 %v207
        %v214 = vunpack.c.l.b16 %v208
        %v215 = vunpack.c.l.b16 %v209
        %v216 = vpack.c.b16 %v214, %v213
        %v217 = vpack.c.b16 %v215, %v215
        %vm218 = vcmask 31744
        %v220 = vsel %vm218, %v216, 0
        %v223 = vsel %vm218, %v217, 0
        %vm225 = vcmask 1041408
        %v227 = vsel %vm225, %v206, 0
        %229 = vmatprep.subr.bf16.mxu0 0
        %230 = vmatpush1.bf16.msra.mxu0 %v227
        %231 = vmatprep.subr.bf16.mxu0 0
        %232 = vmatpush1.bf16.msra.mxu0 0
        %233 = vmatprep.subr.bf16.mxu0 0
        %234 = vmatpush1.bf16.msra.mxu0 0
        %235 = vmatprep.subr.bf16.mxu0 0
        %236 = vmatpush1.bf16.msra.mxu0 0
        %237 = vmatprep.subr.bf16.mxu0 0
        %238 = vmatpush1.bf16.msra.mxu0 0
        %239 = vmatprep.subr.bf16.mxu0 0
        %240 = vmatpush1.bf16.msra.mxu0 0
        %241 = vmatprep.subr.bf16.mxu0 0
        %242 = vmatpush1.bf16.msra.mxu0 0
        %243 = vmatprep.subr.bf16.mxu0 0
        %244 = vmatpush1.bf16.msra.mxu0 0
        %245 = vmatprep.subr.bf16.mxu0 0
        %246 = vmatpush1.bf16.msra.mxu0 0
        %247 = vmatprep.subr.bf16.mxu0 0
        %248 = vmatpush1.bf16.msra.mxu0 0
        %249 = vmatprep.subr.bf16.mxu0 0
        %250 = vmatpush1.bf16.msra.mxu0 0
        %251 = vmatprep.subr.bf16.mxu0 0
        %252 = vmatpush1.bf16.msra.mxu0 0
        %253 = vmatprep.subr.bf16.mxu0 0
        %254 = vmatpush1.bf16.msra.mxu0 0
        %255 = vmatprep.subr.bf16.mxu0 0
        %256 = vmatpush1.bf16.msra.mxu0 0
        %257 = vmatprep.subr.bf16.mxu0 0
        %258 = vmatpush1.bf16.msra.mxu0 0
        %259 = vmatprep.subr.bf16.mxu0 0
        %260 = vmatpush1.bf16.msra.mxu0 0
        %261 = vmatprep.mubr.bf16.mxu0 0
        %262 = vmatmul.mubr.bf16.gmra.mrb[0].mxu0 %v220
        %v263 = vpop.f32.mrb[0].mxu0
        %v264 = vadd.f32 0.0, %v263
        %v265 = vpop.f32.mrb[0].mxu0
        %v266 = vpop.f32.mrb[0].mxu0
        %v267 = vadd.f32 0.0, %v266
        %v268 = vpop.f32.mrb[0].mxu0
        %269 = vmatprep.mubr.bf16.mxu0 0
        %270 = vmatmul.mubr.bf16.gmra.mrb[0].mxu0 %v223
        %v271 = vpop.f32.mrb[0].mxu0
        %v272 = vadd.f32 0.0, %v271
        %v273 = vpop.f32.mrb[0].mxu0
        %v274 = vpop.f32.mrb[0].mxu0
        %v275 = vpop.f32.mrb[0].mxu0
        %276 = vdwg.mxu0
        %v277 = vld [vmem:[%s197] sm:$0xff]
        %v278 = vmul.f32 %v264, %v267
        %279 = vadd.xlane.f32.xlu0 %v278
        %v280 = vpop.xlane.xlu0 %279
        %v281 = vadd.f32 %v277, %v280
        %vm282 = vcmask 7168
        %283 = vst.msk [vmem:[%s197] sm:$0xff] %vm282, %v281
        %v284 = vld [vmem:[%s197] sm:$0xff]
        %285 = vadd.xlane.f32.xlu0 %v272
        %v286 = vpop.xlane.xlu0 %285
        %v287 = vadd.f32 %v284, %v286
        %vm288 = vcmask 15368
        %289 = vst.msk [vmem:[%s197] sm:$0xff] %vm288, %v287
        %v290 = vld [vmem:[%s197] sm:$0xff]
        %v291 = vmul.f32 %v272, %v272
        %292 = vadd.xlane.f32.xlu0 %v291
        %v293 = vpop.xlane.xlu0 %292
        %v294 = vadd.f32 %v290, %v293
        %vm295 = vcmask 23568
        %296 = vst.msk [vmem:[%s197] sm:$0xff] %vm295, %v294
        %p297 = scmp.lt.s32.totalorder %s21, 1
        %s298 = scalar_select %p297, %s21, 1
        %p299 = scmp.lt.s32.totalorder %s22, 0
        %s300 = scalar_select %p299, %s22, 0
        %s301 = sadd.s32 %s300, %s298
        %s302 = smul.addr %s301, 8
        %s303 = scalar_lea.vmem %s2, %s302
        // Predicated region
        $region37: #{tpu_custom_call.1} parent=27 // pred_check
          %p304 = pneg %p108
        $region38: #{tpu_custom_call.1} parent=27 // pred_check_branch
          %306 = sbr.rel (%p304) target = $region40
        $region39: #{tpu_custom_call.1} parent=27 // pred_region
          _
        $region40: #{tpu_custom_call.1} parent=27 // pred_fallthru
          _
      $region28: #{tpu_custom_call.1} parent=5 // pred_fallthru
        _
      %p307 = scmp.le.s32.totalorder 2, %s11
      // Predicated region
      $region41: #{tpu_custom_call.1} parent=5 // pred_check
        %p308 = pneg %p307
      $region42: #{tpu_custom_call.1} parent=5 // pred_check_branch
        %310 = sbr.rel (%p308) target = $region44
      $region43: #{tpu_custom_call.1} parent=5 // pred_region
        %s311 = ssub.s32 %s11, 2
        // Predicated region
        $region45: #{tpu_custom_call.1} parent=43 // pred_check
          %p312 = pneg %p114
        $region46: #{tpu_custom_call.1} parent=43 // pred_check_branch
          %314 = sbr.rel (%p312) target = $region48
        $region47: #{tpu_custom_call.1} parent=43 // pred_region
          %p315 = scmp.lt.s32.totalorder %s24, 1
          %s316 = scalar_select %p315, %s24, 1
          %p317 = scmp.lt.s32.totalorder %s25, 0
          %s318 = scalar_select %p317, %s25, 0
          %s319 = sadd.s32 %s318, %s316
          %s320 = smul.addr %s319, 8
          %s321 = scalar_lea.vmem %s2, %s320
        $region48: #{tpu_custom_call.1} parent=43 // pred_fallthru
          _
      $region44: #{tpu_custom_call.1} parent=5 // pred_fallthru
        _
    $region6: #{tpu_custom_call.1} parent=1 // loop_footer
      %s15 = sadd.s32 1, %s11
    $region7: #{tpu_custom_call.1} parent=1 // loop_footer_branch
      %10 = sbr.rel target = $region3
    $region8: #{tpu_custom_call.1} parent=1 // loop_exit
      _
    %322 = vsyncpa [#allocation3], 1
    %s323 = scalar_lea.sflag [#allocation3], 1
    %324 = vsyncpa %s323, 1

</llo_original>
